<compile_context>
chip_gen: v7x
topology: tpu7x:2x2x1
jax: 0.10.0
libtpu: 0.0.40
codegen_flags: <defaults>
</compile_context>

<pallas_src>
import functools

import jax
import jax.numpy as jnp
from jax.experimental import pallas as pl
from jax.experimental.pallas import tpu as pltpu

LANE = 128
# itemsize -> rows per packed vreg sublane group (full unmasked stores).
_SUBLANE_PACK = {4: 8, 2: 16, 1: 32}


def _round_up(x, m):
    return (x + m - 1) // m * m


def _gather_kernel(ids_ref, w_hbm, out_ref, buf, sems, *, tq, num_rows):
    """One TQ-token tile of the fused vocab-parallel embedding gather.

    ids_ref : [Np]          int32 in SMEM (scalar-prefetched, sentinel-remapped)
    w_hbm   : [num_rows,Dp] stacked table left in HBM (pl.ANY, manual DMA)
    out_ref : [1, TQ, Dp]   output tile (VMEM, auto-pipelined writeback)
    buf     : [2, TQ, Dp]   VMEM staging double buffer
    sems    : [2, TQ]       DMA semaphores (one per staged row per slot)
    """
    i = pl.program_id(0)
    nt = pl.num_programs(0)
    slot = i % 2

    def fetch(tile, slot_):
        base = tile * tq
        for q in range(tq):  # tq is small & static -> unrolled row-gather DMAs
            row = jnp.clip(ids_ref[base + q], 0, num_rows - 1)
            pltpu.make_async_copy(
                w_hbm.at[pl.ds(row, 1)],
                buf.at[slot_, pl.ds(q, 1)],
                sems.at[slot_, q],
            ).start()

    # Prime the pipeline on the first tile.
    @pl.when(i == 0)
    def _():
        fetch(0, 0)

    # Prefetch the next tile's rows into the other slot while this tile drains.
    @pl.when(i + 1 < nt)
    def _():
        fetch(i + 1, 1 - slot)

    # Wait for this tile's TQ row copies (same byte count as the issued copies).
    for q in range(tq):
        pltpu.make_async_copy(
            w_hbm.at[pl.ds(0, 1)],
            buf.at[slot, pl.ds(q, 1)],
            sems.at[slot, q],
        ).wait()

    # Full lane-dense (TQ x Dp) unmasked store.
    out_ref[0] = buf[slot].astype(out_ref.dtype)


def prepare_vocab_parallel_weight(weight_shards):
    """One-time init-side prep (hoisted out of forward).

    Concatenates the per-rank contiguous vocab shards into the full table,
    appends an all-zero sentinel row (target for masked / out-of-range ids),
    and pads the hidden dim to a multiple of 128 lanes.
    Returns ([V+1, Dp] table, original embedding_dim).
    """
    _, D = weight_shards[0].shape
    table = jnp.concatenate(list(weight_shards), axis=0)                # [V, D]
    table = jnp.concatenate([table, jnp.zeros((1, D), table.dtype)], 0)  # +sentinel
    Dp = _round_up(D, LANE)
    if Dp != D:
        table = jnp.pad(table, ((0, 0), (0, Dp - D)))
    return table, D


def vocab_parallel_embedding_forward(input_ids, table, embedding_dim, *, tq=None):
    """VocabParallelEmbedding.forward with all TP ranks fused.

    Masked per-rank partials + all-reduce(sum) over contiguous vocab shards is
    exactly a gather from the stacked table; ids outside [0, V) hit the
    all-zero sentinel row (matching Megatron's input_mask zeroing).

    input_ids : [B, S] integer token ids
    table     : [V+1, Dp] prepared table from prepare_vocab_parallel_weight
    returns   : [B, S, embedding_dim]
    """
    B, S = input_ids.shape
    N = B * S
    Vtot, Dp = table.shape
    V = Vtot - 1                                # last row is the zero sentinel
    dtype = table.dtype
    itemsize = dtype.itemsize

    if tq is None:
        tq = _SUBLANE_PACK.get(itemsize, 8)
    Np = _round_up(N, tq)
    nt = Np // tq

    ids = input_ids.reshape(N).astype(jnp.int32)
    ids = jnp.where((ids >= 0) & (ids < V), ids, V)      # masked ids -> zero row
    if Np != N:
        ids = jnp.pad(ids, (0, Np - N), constant_values=V)

    kern = functools.partial(_gather_kernel, tq=tq, num_rows=Vtot)

    out = pl.pallas_call(
        kern,
        out_shape=jax.ShapeDtypeStruct((nt, tq, Dp), dtype),
        grid_spec=pltpu.PrefetchScalarGridSpec(
            num_scalar_prefetch=1,                          # ids -> SMEM
            grid=(nt,),
            in_specs=[pl.BlockSpec(memory_space=pl.ANY)],   # table stays in HBM
            out_specs=pl.BlockSpec((1, tq, Dp), lambda i, ids: (i, 0, 0)),
            scratch_shapes=[
                pltpu.VMEM((2, tq, Dp), dtype),             # staging double buffer
                pltpu.SemaphoreType.DMA((2, tq)),
            ],
        ),
        compiler_params=pltpu.CompilerParams(
            # Manual double-buffer carries state across grid steps -> sequential.
            dimension_semantics=("arbitrary",),
        ),
        cost_estimate=pl.CostEstimate(
            flops=0,
            transcendentals=0,
            bytes_accessed=int(2 * Np * Dp * itemsize + Np * 4),
        ),
    )(ids, table)

    return out.reshape(Np, Dp)[:N, :embedding_dim].reshape(B, S, embedding_dim)


if __name__ == "__main__":
    # Small, deterministic setup.
    num_embeddings = 64      # global vocab size
    embedding_dim = 32       # hidden size (padded to 128 lanes at init)
    tp_world_size = 2
    vocab_per_partition = num_embeddings // tp_world_size  # 32
    B, S = 2, 8

    key = jax.random.PRNGKey(0)
    wkey, ikey = jax.random.split(key)

    # Deterministic "master weight" (init_method ~ normal), split along the
    # vocab dim exactly like _initialize_affine_weight_cpu (partition_dim=0).
    master_weight = (
        jax.random.normal(wkey, (num_embeddings, embedding_dim), dtype=jnp.float32)
        * 0.02
    )
    weight_shards = [
        master_weight[r * vocab_per_partition:(r + 1) * vocab_per_partition, :]
        for r in range(tp_world_size)
    ]

    # One-time init-side table prep (hoisted out of the forward).
    table, D = prepare_vocab_parallel_weight(weight_shards)

    # Token ids spanning the full global vocab (both shards exercised).
    input_ids = jax.random.randint(ikey, (B, S), 0, num_embeddings, dtype=jnp.int32)

    out = vocab_parallel_embedding_forward(input_ids, table, D)
    out = jax.block_until_ready(out)

    # Reference: plain lookup into the full unsharded table, which the fused
    # masked-partial + all-reduce must reproduce exactly.
    ref = jnp.take(master_weight, input_ids, axis=0)

    assert out.shape == (B, S, embedding_dim), out.shape
    assert jnp.allclose(out, ref, atol=1e-6, rtol=1e-6), float(
        jnp.max(jnp.abs(out - ref))
    )
    print("KERNEL_OK")
</pallas_src>

<mosaic_0001>
module attributes {stable_mosaic.version = 11 : i64} {
  func.func @_gather_kernel(%arg0: i32, %arg1: memref<16xi32, #tpu.memory_space<smem>>, %arg2: memref<65x128xf32, #tpu.memory_space<any>>, %arg3: memref<1x8x128xf32, #tpu.memory_space<vmem>>, %arg4: memref<2x8x128xf32, #tpu.memory_space<vmem>>, %arg5: memref<2x8x!tpu.dma_semaphore, #tpu.memory_space<semaphore_mem>>) attributes {dimension_semantics = [#tpu.dimension_semantics<arbitrary>], iteration_bounds = array<i64: 2>, scalar_prefetch = 1 : i64, scratch_operands = 2 : i64, tpu.core_type = #tpu.core_type<tc>, window_params = [{}, {transform_indices = @transform_1, window_bounds = array<i64: 1, 8, 128>}]} {
    %c2_i32 = arith.constant 2 : i32
    %c0_i32 = arith.constant 0 : i32
    %0 = arith.cmpi eq, %c2_i32, %c0_i32 : i32
    %c1_i32 = arith.constant 1 : i32
    %1 = arith.select %0, %c1_i32, %c2_i32 : i32
    %2 = arith.remsi %arg0, %1 : i32
    %c0_i32_0 = arith.constant 0 : i32
    %3 = arith.cmpi ne, %2, %c0_i32_0 : i32
    %c0_i32_1 = arith.constant 0 : i32
    %4 = arith.cmpi slt, %2, %c0_i32_1 : i32
    %c0_i32_2 = arith.constant 0 : i32
    %5 = arith.cmpi slt, %1, %c0_i32_2 : i32
    %6 = arith.xori %4, %5 : i1
    %7 = arith.andi %6, %3 : i1
    %8 = arith.addi %2, %1 : i32
    %9 = arith.select %7, %8, %2 : i32
    %c0_i32_3 = arith.constant 0 : i32
    %10 = arith.cmpi eq, %arg0, %c0_i32_3 : i32
    %11 = arith.extui %10 : i1 to i32
    %c0_i32_4 = arith.constant 0 : i32
    %12 = arith.cmpi ne, %11, %c0_i32_4 : i32
    scf.if %12 {
      %c0_47 = arith.constant 0 : index
      %63 = memref.load %arg1[%c0_47] : memref<16xi32, #tpu.memory_space<smem>>
      %c0_i32_48 = arith.constant 0 : i32
      %c64_i32 = arith.constant 64 : i32
      %64 = arith.maxsi %c0_i32_48, %63 : i32
      %65 = arith.minsi %c64_i32, %64 : i32
      %c0_i32_49 = arith.constant 0 : i32
      %c0_i32_50 = arith.constant 0 : i32
      %c0_i32_51 = arith.constant 0 : i32
      %c0_i32_52 = arith.constant 0 : i32
      %66 = tpu.memref_slice %arg2[%65, %c0_i32_52] : memref<65x128xf32, #tpu.memory_space<any>> -> memref<1x128xf32, #tpu.memory_space<any>>
      %c0_i32_53 = arith.constant 0 : i32
      %c0_i32_54 = arith.constant 0 : i32
      %67 = tpu.memref_slice %arg4[%c0_i32_49, %c0_i32_53, %c0_i32_54] : memref<2x8x128xf32, #tpu.memory_space<vmem>> -> memref<1x1x128xf32, #tpu.memory_space<vmem>>
      %68 = tpu.memref_squeeze %67 : memref<1x1x128xf32, #tpu.memory_space<vmem>> -> memref<1x128xf32, #tpu.memory_space<vmem>>
      %69 = tpu.memref_slice %arg5[%c0_i32_50, %c0_i32_51] : memref<2x8x!tpu.dma_semaphore, #tpu.memory_space<semaphore_mem>> -> memref<1x1x!tpu.dma_semaphore, #tpu.memory_space<semaphore_mem>>
      %70 = tpu.memref_squeeze %69 : memref<1x1x!tpu.dma_semaphore, #tpu.memory_space<semaphore_mem>> -> memref<!tpu.dma_semaphore, #tpu.memory_space<semaphore_mem>>
      tpu.enqueue_dma source(%66 : memref<1x128xf32, #tpu.memory_space<any>>) target(%68 : memref<1x128xf32, #tpu.memory_space<vmem>>) target_semaphore(%70 : memref<!tpu.dma_semaphore, #tpu.memory_space<semaphore_mem>>)
      %c1 = arith.constant 1 : index
      %71 = memref.load %arg1[%c1] : memref<16xi32, #tpu.memory_space<smem>>
      %c0_i32_55 = arith.constant 0 : i32
      %c64_i32_56 = arith.constant 64 : i32
      %72 = arith.maxsi %c0_i32_55, %71 : i32
      %73 = arith.minsi %c64_i32_56, %72 : i32
      %c0_i32_57 = arith.constant 0 : i32
      %c0_i32_58 = arith.constant 0 : i32
      %c1_i32_59 = arith.constant 1 : i32
      %c0_i32_60 = arith.constant 0 : i32
      %74 = tpu.memref_slice %arg2[%73, %c0_i32_60] : memref<65x128xf32, #tpu.memory_space<any>> -> memref<1x128xf32, #tpu.memory_space<any>>
      %c1_i32_61 = arith.constant 1 : i32
      %c0_i32_62 = arith.constant 0 : i32
      %75 = tpu.memref_slice %arg4[%c0_i32_57, %c1_i32_61, %c0_i32_62] : memref<2x8x128xf32, #tpu.memory_space<vmem>> -> memref<1x1x128xf32, #tpu.memory_space<vmem>>
      %76 = tpu.memref_squeeze %75 : memref<1x1x128xf32, #tpu.memory_space<vmem>> -> memref<1x128xf32, #tpu.memory_space<vmem>>
      %77 = tpu.memref_slice %arg5[%c0_i32_58, %c1_i32_59] : memref<2x8x!tpu.dma_semaphore, #tpu.memory_space<semaphore_mem>> -> memref<1x1x!tpu.dma_semaphore, #tpu.memory_space<semaphore_mem>>
      %78 = tpu.memref_squeeze %77 : memref<1x1x!tpu.dma_semaphore, #tpu.memory_space<semaphore_mem>> -> memref<!tpu.dma_semaphore, #tpu.memory_space<semaphore_mem>>
      tpu.enqueue_dma source(%74 : memref<1x128xf32, #tpu.memory_space<any>>) target(%76 : memref<1x128xf32, #tpu.memory_space<vmem>>) target_semaphore(%78 : memref<!tpu.dma_semaphore, #tpu.memory_space<semaphore_mem>>)
      %c2 = arith.constant 2 : index
      %79 = memref.load %arg1[%c2] : memref<16xi32, #tpu.memory_space<smem>>
      %c0_i32_63 = arith.constant 0 : i32
      %c64_i32_64 = arith.constant 64 : i32
      %80 = arith.maxsi %c0_i32_63, %79 : i32
      %81 = arith.minsi %c64_i32_64, %80 : i32
      %c0_i32_65 = arith.constant 0 : i32
      %c0_i32_66 = arith.constant 0 : i32
      %c2_i32_67 = arith.constant 2 : i32
      %c0_i32_68 = arith.constant 0 : i32
      %82 = tpu.memref_slice %arg2[%81, %c0_i32_68] : memref<65x128xf32, #tpu.memory_space<any>> -> memref<1x128xf32, #tpu.memory_space<any>>
      %c2_i32_69 = arith.constant 2 : i32
      %c0_i32_70 = arith.constant 0 : i32
      %83 = tpu.memref_slice %arg4[%c0_i32_65, %c2_i32_69, %c0_i32_70] : memref<2x8x128xf32, #tpu.memory_space<vmem>> -> memref<1x1x128xf32, #tpu.memory_space<vmem>>
      %84 = tpu.memref_squeeze %83 : memref<1x1x128xf32, #tpu.memory_space<vmem>> -> memref<1x128xf32, #tpu.memory_space<vmem>>
      %85 = tpu.memref_slice %arg5[%c0_i32_66, %c2_i32_67] : memref<2x8x!tpu.dma_semaphore, #tpu.memory_space<semaphore_mem>> -> memref<1x1x!tpu.dma_semaphore, #tpu.memory_space<semaphore_mem>>
      %86 = tpu.memref_squeeze %85 : memref<1x1x!tpu.dma_semaphore, #tpu.memory_space<semaphore_mem>> -> memref<!tpu.dma_semaphore, #tpu.memory_space<semaphore_mem>>
      tpu.enqueue_dma source(%82 : memref<1x128xf32, #tpu.memory_space<any>>) target(%84 : memref<1x128xf32, #tpu.memory_space<vmem>>) target_semaphore(%86 : memref<!tpu.dma_semaphore, #tpu.memory_space<semaphore_mem>>)
      %c3 = arith.constant 3 : index
      %87 = memref.load %arg1[%c3] : memref<16xi32, #tpu.memory_space<smem>>
      %c0_i32_71 = arith.constant 0 : i32
      %c64_i32_72 = arith.constant 64 : i32
      %88 = arith.maxsi %c0_i32_71, %87 : i32
      %89 = arith.minsi %c64_i32_72, %88 : i32
      %c0_i32_73 = arith.constant 0 : i32
      %c0_i32_74 = arith.constant 0 : i32
      %c3_i32_75 = arith.constant 3 : i32
      %c0_i32_76 = arith.constant 0 : i32
      %90 = tpu.memref_slice %arg2[%89, %c0_i32_76] : memref<65x128xf32, #tpu.memory_space<any>> -> memref<1x128xf32, #tpu.memory_space<any>>
      %c3_i32_77 = arith.constant 3 : i32
      %c0_i32_78 = arith.constant 0 : i32
      %91 = tpu.memref_slice %arg4[%c0_i32_73, %c3_i32_77, %c0_i32_78] : memref<2x8x128xf32, #tpu.memory_space<vmem>> -> memref<1x1x128xf32, #tpu.memory_space<vmem>>
      %92 = tpu.memref_squeeze %91 : memref<1x1x128xf32, #tpu.memory_space<vmem>> -> memref<1x128xf32, #tpu.memory_space<vmem>>
      %93 = tpu.memref_slice %arg5[%c0_i32_74, %c3_i32_75] : memref<2x8x!tpu.dma_semaphore, #tpu.memory_space<semaphore_mem>> -> memref<1x1x!tpu.dma_semaphore, #tpu.memory_space<semaphore_mem>>
      %94 = tpu.memref_squeeze %93 : memref<1x1x!tpu.dma_semaphore, #tpu.memory_space<semaphore_mem>> -> memref<!tpu.dma_semaphore, #tpu.memory_space<semaphore_mem>>
      tpu.enqueue_dma source(%90 : memref<1x128xf32, #tpu.memory_space<any>>) target(%92 : memref<1x128xf32, #tpu.memory_space<vmem>>) target_semaphore(%94 : memref<!tpu.dma_semaphore, #tpu.memory_space<semaphore_mem>>)
      %c4 = arith.constant 4 : index
      %95 = memref.load %arg1[%c4] : memref<16xi32, #tpu.memory_space<smem>>
      %c0_i32_79 = arith.constant 0 : i32
      %c64_i32_80 = arith.constant 64 : i32
      %96 = arith.maxsi %c0_i32_79, %95 : i32
      %97 = arith.minsi %c64_i32_80, %96 : i32
      %c0_i32_81 = arith.constant 0 : i32
      %c0_i32_82 = arith.constant 0 : i32
      %c4_i32_83 = arith.constant 4 : i32
      %c0_i32_84 = arith.constant 0 : i32
      %98 = tpu.memref_slice %arg2[%97, %c0_i32_84] : memref<65x128xf32, #tpu.memory_space<any>> -> memref<1x128xf32, #tpu.memory_space<any>>
      %c4_i32_85 = arith.constant 4 : i32
      %c0_i32_86 = arith.constant 0 : i32
      %99 = tpu.memref_slice %arg4[%c0_i32_81, %c4_i32_85, %c0_i32_86] : memref<2x8x128xf32, #tpu.memory_space<vmem>> -> memref<1x1x128xf32, #tpu.memory_space<vmem>>
      %100 = tpu.memref_squeeze %99 : memref<1x1x128xf32, #tpu.memory_space<vmem>> -> memref<1x128xf32, #tpu.memory_space<vmem>>
      %101 = tpu.memref_slice %arg5[%c0_i32_82, %c4_i32_83] : memref<2x8x!tpu.dma_semaphore, #tpu.memory_space<semaphore_mem>> -> memref<1x1x!tpu.dma_semaphore, #tpu.memory_space<semaphore_mem>>
      %102 = tpu.memref_squeeze %101 : memref<1x1x!tpu.dma_semaphore, #tpu.memory_space<semaphore_mem>> -> memref<!tpu.dma_semaphore, #tpu.memory_space<semaphore_mem>>
      tpu.enqueue_dma source(%98 : memref<1x128xf32, #tpu.memory_space<any>>) target(%100 : memref<1x128xf32, #tpu.memory_space<vmem>>) target_semaphore(%102 : memref<!tpu.dma_semaphore, #tpu.memory_space<semaphore_mem>>)
      %c5 = arith.constant 5 : index
      %103 = memref.load %arg1[%c5] : memref<16xi32, #tpu.memory_space<smem>>
      %c0_i32_87 = arith.constant 0 : i32
      %c64_i32_88 = arith.constant 64 : i32
      %104 = arith.maxsi %c0_i32_87, %103 : i32
      %105 = arith.minsi %c64_i32_88, %104 : i32
      %c0_i32_89 = arith.constant 0 : i32
      %c0_i32_90 = arith.constant 0 : i32
      %c5_i32_91 = arith.constant 5 : i32
      %c0_i32_92 = arith.constant 0 : i32
      %106 = tpu.memref_slice %arg2[%105, %c0_i32_92] : memref<65x128xf32, #tpu.memory_space<any>> -> memref<1x128xf32, #tpu.memory_space<any>>
      %c5_i32_93 = arith.constant 5 : i32
      %c0_i32_94 = arith.constant 0 : i32
      %107 = tpu.memref_slice %arg4[%c0_i32_89, %c5_i32_93, %c0_i32_94] : memref<2x8x128xf32, #tpu.memory_space<vmem>> -> memref<1x1x128xf32, #tpu.memory_space<vmem>>
      %108 = tpu.memref_squeeze %107 : memref<1x1x128xf32, #tpu.memory_space<vmem>> -> memref<1x128xf32, #tpu.memory_space<vmem>>
      %109 = tpu.memref_slice %arg5[%c0_i32_90, %c5_i32_91] : memref<2x8x!tpu.dma_semaphore, #tpu.memory_space<semaphore_mem>> -> memref<1x1x!tpu.dma_semaphore, #tpu.memory_space<semaphore_mem>>
      %110 = tpu.memref_squeeze %109 : memref<1x1x!tpu.dma_semaphore, #tpu.memory_space<semaphore_mem>> -> memref<!tpu.dma_semaphore, #tpu.memory_space<semaphore_mem>>
      tpu.enqueue_dma source(%106 : memref<1x128xf32, #tpu.memory_space<any>>) target(%108 : memref<1x128xf32, #tpu.memory_space<vmem>>) target_semaphore(%110 : memref<!tpu.dma_semaphore, #tpu.memory_space<semaphore_mem>>)
      %c6 = arith.constant 6 : index
      %111 = memref.load %arg1[%c6] : memref<16xi32, #tpu.memory_space<smem>>
      %c0_i32_95 = arith.constant 0 : i32
      %c64_i32_96 = arith.constant 64 : i32
      %112 = arith.maxsi %c0_i32_95, %111 : i32
      %113 = arith.minsi %c64_i32_96, %112 : i32
      %c0_i32_97 = arith.constant 0 : i32
      %c0_i32_98 = arith.constant 0 : i32
      %c6_i32_99 = arith.constant 6 : i32
      %c0_i32_100 = arith.constant 0 : i32
      %114 = tpu.memref_slice %arg2[%113, %c0_i32_100] : memref<65x128xf32, #tpu.memory_space<any>> -> memref<1x128xf32, #tpu.memory_space<any>>
      %c6_i32_101 = arith.constant 6 : i32
      %c0_i32_102 = arith.constant 0 : i32
      %115 = tpu.memref_slice %arg4[%c0_i32_97, %c6_i32_101, %c0_i32_102] : memref<2x8x128xf32, #tpu.memory_space<vmem>> -> memref<1x1x128xf32, #tpu.memory_space<vmem>>
      %116 = tpu.memref_squeeze %115 : memref<1x1x128xf32, #tpu.memory_space<vmem>> -> memref<1x128xf32, #tpu.memory_space<vmem>>
      %117 = tpu.memref_slice %arg5[%c0_i32_98, %c6_i32_99] : memref<2x8x!tpu.dma_semaphore, #tpu.memory_space<semaphore_mem>> -> memref<1x1x!tpu.dma_semaphore, #tpu.memory_space<semaphore_mem>>
      %118 = tpu.memref_squeeze %117 : memref<1x1x!tpu.dma_semaphore, #tpu.memory_space<semaphore_mem>> -> memref<!tpu.dma_semaphore, #tpu.memory_space<semaphore_mem>>
      tpu.enqueue_dma source(%114 : memref<1x128xf32, #tpu.memory_space<any>>) target(%116 : memref<1x128xf32, #tpu.memory_space<vmem>>) target_semaphore(%118 : memref<!tpu.dma_semaphore, #tpu.memory_space<semaphore_mem>>)
      %c7 = arith.constant 7 : index
      %119 = memref.load %arg1[%c7] : memref<16xi32, #tpu.memory_space<smem>>
      %c0_i32_103 = arith.constant 0 : i32
      %c64_i32_104 = arith.constant 64 : i32
      %120 = arith.maxsi %c0_i32_103, %119 : i32
      %121 = arith.minsi %c64_i32_104, %120 : i32
      %c0_i32_105 = arith.constant 0 : i32
      %c0_i32_106 = arith.constant 0 : i32
      %c7_i32_107 = arith.constant 7 : i32
      %c0_i32_108 = arith.constant 0 : i32
      %122 = tpu.memref_slice %arg2[%121, %c0_i32_108] : memref<65x128xf32, #tpu.memory_space<any>> -> memref<1x128xf32, #tpu.memory_space<any>>
      %c7_i32_109 = arith.constant 7 : i32
      %c0_i32_110 = arith.constant 0 : i32
      %123 = tpu.memref_slice %arg4[%c0_i32_105, %c7_i32_109, %c0_i32_110] : memref<2x8x128xf32, #tpu.memory_space<vmem>> -> memref<1x1x128xf32, #tpu.memory_space<vmem>>
      %124 = tpu.memref_squeeze %123 : memref<1x1x128xf32, #tpu.memory_space<vmem>> -> memref<1x128xf32, #tpu.memory_space<vmem>>
      %125 = tpu.memref_slice %arg5[%c0_i32_106, %c7_i32_107] : memref<2x8x!tpu.dma_semaphore, #tpu.memory_space<semaphore_mem>> -> memref<1x1x!tpu.dma_semaphore, #tpu.memory_space<semaphore_mem>>
      %126 = tpu.memref_squeeze %125 : memref<1x1x!tpu.dma_semaphore, #tpu.memory_space<semaphore_mem>> -> memref<!tpu.dma_semaphore, #tpu.memory_space<semaphore_mem>>
      tpu.enqueue_dma source(%122 : memref<1x128xf32, #tpu.memory_space<any>>) target(%124 : memref<1x128xf32, #tpu.memory_space<vmem>>) target_semaphore(%126 : memref<!tpu.dma_semaphore, #tpu.memory_space<semaphore_mem>>)
    } else {
    }
    %c1_i32_5 = arith.constant 1 : i32
    %13 = arith.addi %arg0, %c1_i32_5 : i32
    %c2_i32_6 = arith.constant 2 : i32
    %14 = arith.cmpi slt, %13, %c2_i32_6 : i32
    %15 = arith.extui %14 : i1 to i32
    %c0_i32_7 = arith.constant 0 : i32
    %16 = arith.cmpi ne, %15, %c0_i32_7 : i32
    scf.if %16 {
      %c1_i32_47 = arith.constant 1 : i32
      %63 = arith.addi %arg0, %c1_i32_47 : i32
      %c1_i32_48 = arith.constant 1 : i32
      %64 = arith.subi %c1_i32_48, %9 : i32
      %c8_i32 = arith.constant 8 : i32
      %65 = arith.muli %63, %c8_i32 : i32
      %c0_i32_49 = arith.constant 0 : i32
      %66 = arith.addi %65, %c0_i32_49 : i32
      %67 = arith.index_cast %66 : i32 to index
      %68 = memref.load %arg1[%67] : memref<16xi32, #tpu.memory_space<smem>>
      %c0_i32_50 = arith.constant 0 : i32
      %c64_i32 = arith.constant 64 : i32
      %69 = arith.maxsi %c0_i32_50, %68 : i32
      %70 = arith.minsi %c64_i32, %69 : i32
      %c0_i32_51 = arith.constant 0 : i32
      %c0_i32_52 = arith.constant 0 : i32
      %71 = tpu.memref_slice %arg2[%70, %c0_i32_52] : memref<65x128xf32, #tpu.memory_space<any>> -> memref<1x128xf32, #tpu.memory_space<any>>
      %c0_i32_53 = arith.constant 0 : i32
      %c0_i32_54 = arith.constant 0 : i32
      %72 = tpu.memref_slice %arg4[%64, %c0_i32_53, %c0_i32_54] : memref<2x8x128xf32, #tpu.memory_space<vmem>> -> memref<1x1x128xf32, #tpu.memory_space<vmem>>
      %73 = tpu.memref_squeeze %72 : memref<1x1x128xf32, #tpu.memory_space<vmem>> -> memref<1x128xf32, #tpu.memory_space<vmem>>
      %74 = tpu.memref_slice %arg5[%64, %c0_i32_51] : memref<2x8x!tpu.dma_semaphore, #tpu.memory_space<semaphore_mem>> -> memref<1x1x!tpu.dma_semaphore, #tpu.memory_space<semaphore_mem>>
      %75 = tpu.memref_squeeze %74 : memref<1x1x!tpu.dma_semaphore, #tpu.memory_space<semaphore_mem>> -> memref<!tpu.dma_semaphore, #tpu.memory_space<semaphore_mem>>
      tpu.enqueue_dma source(%71 : memref<1x128xf32, #tpu.memory_space<any>>) target(%73 : memref<1x128xf32, #tpu.memory_space<vmem>>) target_semaphore(%75 : memref<!tpu.dma_semaphore, #tpu.memory_space<semaphore_mem>>)
      %c1_i32_55 = arith.constant 1 : i32
      %76 = arith.addi %65, %c1_i32_55 : i32
      %77 = arith.index_cast %76 : i32 to index
      %78 = memref.load %arg1[%77] : memref<16xi32, #tpu.memory_space<smem>>
      %c0_i32_56 = arith.constant 0 : i32
      %c64_i32_57 = arith.constant 64 : i32
      %79 = arith.maxsi %c0_i32_56, %78 : i32
      %80 = arith.minsi %c64_i32_57, %79 : i32
      %c1_i32_58 = arith.constant 1 : i32
      %c0_i32_59 = arith.constant 0 : i32
      %81 = tpu.memref_slice %arg2[%80, %c0_i32_59] : memref<65x128xf32, #tpu.memory_space<any>> -> memref<1x128xf32, #tpu.memory_space<any>>
      %c1_i32_60 = arith.constant 1 : i32
      %c0_i32_61 = arith.constant 0 : i32
      %82 = tpu.memref_slice %arg4[%64, %c1_i32_60, %c0_i32_61] : memref<2x8x128xf32, #tpu.memory_space<vmem>> -> memref<1x1x128xf32, #tpu.memory_space<vmem>>
      %83 = tpu.memref_squeeze %82 : memref<1x1x128xf32, #tpu.memory_space<vmem>> -> memref<1x128xf32, #tpu.memory_space<vmem>>
      %84 = tpu.memref_slice %arg5[%64, %c1_i32_58] : memref<2x8x!tpu.dma_semaphore, #tpu.memory_space<semaphore_mem>> -> memref<1x1x!tpu.dma_semaphore, #tpu.memory_space<semaphore_mem>>
      %85 = tpu.memref_squeeze %84 : memref<1x1x!tpu.dma_semaphore, #tpu.memory_space<semaphore_mem>> -> memref<!tpu.dma_semaphore, #tpu.memory_space<semaphore_mem>>
      tpu.enqueue_dma source(%81 : memref<1x128xf32, #tpu.memory_space<any>>) target(%83 : memref<1x128xf32, #tpu.memory_space<vmem>>) target_semaphore(%85 : memref<!tpu.dma_semaphore, #tpu.memory_space<semaphore_mem>>)
      %c2_i32_62 = arith.constant 2 : i32
      %86 = arith.addi %65, %c2_i32_62 : i32
      %87 = arith.index_cast %86 : i32 to index
      %88 = memref.load %arg1[%87] : memref<16xi32, #tpu.memory_space<smem>>
      %c0_i32_63 = arith.constant 0 : i32
      %c64_i32_64 = arith.constant 64 : i32
      %89 = arith.maxsi %c0_i32_63, %88 : i32
      %90 = arith.minsi %c64_i32_64, %89 : i32
      %c2_i32_65 = arith.constant 2 : i32
      %c0_i32_66 = arith.constant 0 : i32
      %91 = tpu.memref_slice %arg2[%90, %c0_i32_66] : memref<65x128xf32, #tpu.memory_space<any>> -> memref<1x128xf32, #tpu.memory_space<any>>
      %c2_i32_67 = arith.constant 2 : i32
      %c0_i32_68 = arith.constant 0 : i32
      %92 = tpu.memref_slice %arg4[%64, %c2_i32_67, %c0_i32_68] : memref<2x8x128xf32, #tpu.memory_space<vmem>> -> memref<1x1x128xf32, #tpu.memory_space<vmem>>
      %93 = tpu.memref_squeeze %92 : memref<1x1x128xf32, #tpu.memory_space<vmem>> -> memref<1x128xf32, #tpu.memory_space<vmem>>
      %94 = tpu.memref_slice %arg5[%64, %c2_i32_65] : memref<2x8x!tpu.dma_semaphore, #tpu.memory_space<semaphore_mem>> -> memref<1x1x!tpu.dma_semaphore, #tpu.memory_space<semaphore_mem>>
      %95 = tpu.memref_squeeze %94 : memref<1x1x!tpu.dma_semaphore, #tpu.memory_space<semaphore_mem>> -> memref<!tpu.dma_semaphore, #tpu.memory_space<semaphore_mem>>
      tpu.enqueue_dma source(%91 : memref<1x128xf32, #tpu.memory_space<any>>) target(%93 : memref<1x128xf32, #tpu.memory_space<vmem>>) target_semaphore(%95 : memref<!tpu.dma_semaphore, #tpu.memory_space<semaphore_mem>>)
      %c3_i32_69 = arith.constant 3 : i32
      %96 = arith.addi %65, %c3_i32_69 : i32
      %97 = arith.index_cast %96 : i32 to index
      %98 = memref.load %arg1[%97] : memref<16xi32, #tpu.memory_space<smem>>
      %c0_i32_70 = arith.constant 0 : i32
      %c64_i32_71 = arith.constant 64 : i32
      %99 = arith.maxsi %c0_i32_70, %98 : i32
      %100 = arith.minsi %c64_i32_71, %99 : i32
      %c3_i32_72 = arith.constant 3 : i32
      %c0_i32_73 = arith.constant 0 : i32
      %101 = tpu.memref_slice %arg2[%100, %c0_i32_73] : memref<65x128xf32, #tpu.memory_space<any>> -> memref<1x128xf32, #tpu.memory_space<any>>
      %c3_i32_74 = arith.constant 3 : i32
      %c0_i32_75 = arith.constant 0 : i32
      %102 = tpu.memref_slice %arg4[%64, %c3_i32_74, %c0_i32_75] : memref<2x8x128xf32, #tpu.memory_space<vmem>> -> memref<1x1x128xf32, #tpu.memory_space<vmem>>
      %103 = tpu.memref_squeeze %102 : memref<1x1x128xf32, #tpu.memory_space<vmem>> -> memref<1x128xf32, #tpu.memory_space<vmem>>
      %104 = tpu.memref_slice %arg5[%64, %c3_i32_72] : memref<2x8x!tpu.dma_semaphore, #tpu.memory_space<semaphore_mem>> -> memref<1x1x!tpu.dma_semaphore, #tpu.memory_space<semaphore_mem>>
      %105 = tpu.memref_squeeze %104 : memref<1x1x!tpu.dma_semaphore, #tpu.memory_space<semaphore_mem>> -> memref<!tpu.dma_semaphore, #tpu.memory_space<semaphore_mem>>
      tpu.enqueue_dma source(%101 : memref<1x128xf32, #tpu.memory_space<any>>) target(%103 : memref<1x128xf32, #tpu.memory_space<vmem>>) target_semaphore(%105 : memref<!tpu.dma_semaphore, #tpu.memory_space<semaphore_mem>>)
      %c4_i32_76 = arith.constant 4 : i32
      %106 = arith.addi %65, %c4_i32_76 : i32
      %107 = arith.index_cast %106 : i32 to index
      %108 = memref.load %arg1[%107] : memref<16xi32, #tpu.memory_space<smem>>
      %c0_i32_77 = arith.constant 0 : i32
      %c64_i32_78 = arith.constant 64 : i32
      %109 = arith.maxsi %c0_i32_77, %108 : i32
      %110 = arith.minsi %c64_i32_78, %109 : i32
      %c4_i32_79 = arith.constant 4 : i32
      %c0_i32_80 = arith.constant 0 : i32
      %111 = tpu.memref_slice %arg2[%110, %c0_i32_80] : memref<65x128xf32, #tpu.memory_space<any>> -> memref<1x128xf32, #tpu.memory_space<any>>
      %c4_i32_81 = arith.constant 4 : i32
      %c0_i32_82 = arith.constant 0 : i32
      %112 = tpu.memref_slice %arg4[%64, %c4_i32_81, %c0_i32_82] : memref<2x8x128xf32, #tpu.memory_space<vmem>> -> memref<1x1x128xf32, #tpu.memory_space<vmem>>
      %113 = tpu.memref_squeeze %112 : memref<1x1x128xf32, #tpu.memory_space<vmem>> -> memref<1x128xf32, #tpu.memory_space<vmem>>
      %114 = tpu.memref_slice %arg5[%64, %c4_i32_79] : memref<2x8x!tpu.dma_semaphore, #tpu.memory_space<semaphore_mem>> -> memref<1x1x!tpu.dma_semaphore, #tpu.memory_space<semaphore_mem>>
      %115 = tpu.memref_squeeze %114 : memref<1x1x!tpu.dma_semaphore, #tpu.memory_space<semaphore_mem>> -> memref<!tpu.dma_semaphore, #tpu.memory_space<semaphore_mem>>
      tpu.enqueue_dma source(%111 : memref<1x128xf32, #tpu.memory_space<any>>) target(%113 : memref<1x128xf32, #tpu.memory_space<vmem>>) target_semaphore(%115 : memref<!tpu.dma_semaphore, #tpu.memory_space<semaphore_mem>>)
      %c5_i32_83 = arith.constant 5 : i32
      %116 = arith.addi %65, %c5_i32_83 : i32
      %117 = arith.index_cast %116 : i32 to index
      %118 = memref.load %arg1[%117] : memref<16xi32, #tpu.memory_space<smem>>
      %c0_i32_84 = arith.constant 0 : i32
      %c64_i32_85 = arith.constant 64 : i32
      %119 = arith.maxsi %c0_i32_84, %118 : i32
      %120 = arith.minsi %c64_i32_85, %119 : i32
      %c5_i32_86 = arith.constant 5 : i32
      %c0_i32_87 = arith.constant 0 : i32
      %121 = tpu.memref_slice %arg2[%120, %c0_i32_87] : memref<65x128xf32, #tpu.memory_space<any>> -> memref<1x128xf32, #tpu.memory_space<any>>
      %c5_i32_88 = arith.constant 5 : i32
      %c0_i32_89 = arith.constant 0 : i32
      %122 = tpu.memref_slice %arg4[%64, %c5_i32_88, %c0_i32_89] : memref<2x8x128xf32, #tpu.memory_space<vmem>> -> memref<1x1x128xf32, #tpu.memory_space<vmem>>
      %123 = tpu.memref_squeeze %122 : memref<1x1x128xf32, #tpu.memory_space<vmem>> -> memref<1x128xf32, #tpu.memory_space<vmem>>
      %124 = tpu.memref_slice %arg5[%64, %c5_i32_86] : memref<2x8x!tpu.dma_semaphore, #tpu.memory_space<semaphore_mem>> -> memref<1x1x!tpu.dma_semaphore, #tpu.memory_space<semaphore_mem>>
      %125 = tpu.memref_squeeze %124 : memref<1x1x!tpu.dma_semaphore, #tpu.memory_space<semaphore_mem>> -> memref<!tpu.dma_semaphore, #tpu.memory_space<semaphore_mem>>
      tpu.enqueue_dma source(%121 : memref<1x128xf32, #tpu.memory_space<any>>) target(%123 : memref<1x128xf32, #tpu.memory_space<vmem>>) target_semaphore(%125 : memref<!tpu.dma_semaphore, #tpu.memory_space<semaphore_mem>>)
      %c6_i32_90 = arith.constant 6 : i32
      %126 = arith.addi %65, %c6_i32_90 : i32
      %127 = arith.index_cast %126 : i32 to index
      %128 = memref.load %arg1[%127] : memref<16xi32, #tpu.memory_space<smem>>
      %c0_i32_91 = arith.constant 0 : i32
      %c64_i32_92 = arith.constant 64 : i32
      %129 = arith.maxsi %c0_i32_91, %128 : i32
      %130 = arith.minsi %c64_i32_92, %129 : i32
      %c6_i32_93 = arith.constant 6 : i32
      %c0_i32_94 = arith.constant 0 : i32
      %131 = tpu.memref_slice %arg2[%130, %c0_i32_94] : memref<65x128xf32, #tpu.memory_space<any>> -> memref<1x128xf32, #tpu.memory_space<any>>
      %c6_i32_95 = arith.constant 6 : i32
      %c0_i32_96 = arith.constant 0 : i32
      %132 = tpu.memref_slice %arg4[%64, %c6_i32_95, %c0_i32_96] : memref<2x8x128xf32, #tpu.memory_space<vmem>> -> memref<1x1x128xf32, #tpu.memory_space<vmem>>
      %133 = tpu.memref_squeeze %132 : memref<1x1x128xf32, #tpu.memory_space<vmem>> -> memref<1x128xf32, #tpu.memory_space<vmem>>
      %134 = tpu.memref_slice %arg5[%64, %c6_i32_93] : memref<2x8x!tpu.dma_semaphore, #tpu.memory_space<semaphore_mem>> -> memref<1x1x!tpu.dma_semaphore, #tpu.memory_space<semaphore_mem>>
      %135 = tpu.memref_squeeze %134 : memref<1x1x!tpu.dma_semaphore, #tpu.memory_space<semaphore_mem>> -> memref<!tpu.dma_semaphore, #tpu.memory_space<semaphore_mem>>
      tpu.enqueue_dma source(%131 : memref<1x128xf32, #tpu.memory_space<any>>) target(%133 : memref<1x128xf32, #tpu.memory_space<vmem>>) target_semaphore(%135 : memref<!tpu.dma_semaphore, #tpu.memory_space<semaphore_mem>>)
      %c7_i32_97 = arith.constant 7 : i32
      %136 = arith.addi %65, %c7_i32_97 : i32
      %137 = arith.index_cast %136 : i32 to index
      %138 = memref.load %arg1[%137] : memref<16xi32, #tpu.memory_space<smem>>
      %c0_i32_98 = arith.constant 0 : i32
      %c64_i32_99 = arith.constant 64 : i32
      %139 = arith.maxsi %c0_i32_98, %138 : i32
      %140 = arith.minsi %c64_i32_99, %139 : i32
      %c7_i32_100 = arith.constant 7 : i32
      %c0_i32_101 = arith.constant 0 : i32
      %141 = tpu.memref_slice %arg2[%140, %c0_i32_101] : memref<65x128xf32, #tpu.memory_space<any>> -> memref<1x128xf32, #tpu.memory_space<any>>
      %c7_i32_102 = arith.constant 7 : i32
      %c0_i32_103 = arith.constant 0 : i32
      %142 = tpu.memref_slice %arg4[%64, %c7_i32_102, %c0_i32_103] : memref<2x8x128xf32, #tpu.memory_space<vmem>> -> memref<1x1x128xf32, #tpu.memory_space<vmem>>
      %143 = tpu.memref_squeeze %142 : memref<1x1x128xf32, #tpu.memory_space<vmem>> -> memref<1x128xf32, #tpu.memory_space<vmem>>
      %144 = tpu.memref_slice %arg5[%64, %c7_i32_100] : memref<2x8x!tpu.dma_semaphore, #tpu.memory_space<semaphore_mem>> -> memref<1x1x!tpu.dma_semaphore, #tpu.memory_space<semaphore_mem>>
      %145 = tpu.memref_squeeze %144 : memref<1x1x!tpu.dma_semaphore, #tpu.memory_space<semaphore_mem>> -> memref<!tpu.dma_semaphore, #tpu.memory_space<semaphore_mem>>
      tpu.enqueue_dma source(%141 : memref<1x128xf32, #tpu.memory_space<any>>) target(%143 : memref<1x128xf32, #tpu.memory_space<vmem>>) target_semaphore(%145 : memref<!tpu.dma_semaphore, #tpu.memory_space<semaphore_mem>>)
    } else {
    }
    %c0_i32_8 = arith.constant 0 : i32
    %c0_i32_9 = arith.constant 0 : i32
    %c0_i32_10 = arith.constant 0 : i32
    %17 = tpu.memref_slice %arg2[%c0_i32_9, %c0_i32_10] : memref<65x128xf32, #tpu.memory_space<any>> -> memref<1x128xf32, #tpu.memory_space<any>>
    %c0_i32_11 = arith.constant 0 : i32
    %c0_i32_12 = arith.constant 0 : i32
    %18 = tpu.memref_slice %arg4[%9, %c0_i32_11, %c0_i32_12] : memref<2x8x128xf32, #tpu.memory_space<vmem>> -> memref<1x1x128xf32, #tpu.memory_space<vmem>>
    %19 = tpu.memref_squeeze %18 : memref<1x1x128xf32, #tpu.memory_space<vmem>> -> memref<1x128xf32, #tpu.memory_space<vmem>>
    %20 = tpu.memref_slice %arg5[%9, %c0_i32_8] : memref<2x8x!tpu.dma_semaphore, #tpu.memory_space<semaphore_mem>> -> memref<1x1x!tpu.dma_semaphore, #tpu.memory_space<semaphore_mem>>
    %21 = tpu.memref_squeeze %20 : memref<1x1x!tpu.dma_semaphore, #tpu.memory_space<semaphore_mem>> -> memref<!tpu.dma_semaphore, #tpu.memory_space<semaphore_mem>>
    tpu.wait_dma2 semaphore(%21 : memref<!tpu.dma_semaphore, #tpu.memory_space<semaphore_mem>>) src(%17 : memref<1x128xf32, #tpu.memory_space<any>>) dst(%19 : memref<1x128xf32, #tpu.memory_space<vmem>>)
    %c1_i32_13 = arith.constant 1 : i32
    %c0_i32_14 = arith.constant 0 : i32
    %c0_i32_15 = arith.constant 0 : i32
    %22 = tpu.memref_slice %arg2[%c0_i32_14, %c0_i32_15] : memref<65x128xf32, #tpu.memory_space<any>> -> memref<1x128xf32, #tpu.memory_space<any>>
    %c1_i32_16 = arith.constant 1 : i32
    %c0_i32_17 = arith.constant 0 : i32
    %23 = tpu.memref_slice %arg4[%9, %c1_i32_16, %c0_i32_17] : memref<2x8x128xf32, #tpu.memory_space<vmem>> -> memref<1x1x128xf32, #tpu.memory_space<vmem>>
    %24 = tpu.memref_squeeze %23 : memref<1x1x128xf32, #tpu.memory_space<vmem>> -> memref<1x128xf32, #tpu.memory_space<vmem>>
    %25 = tpu.memref_slice %arg5[%9, %c1_i32_13] : memref<2x8x!tpu.dma_semaphore, #tpu.memory_space<semaphore_mem>> -> memref<1x1x!tpu.dma_semaphore, #tpu.memory_space<semaphore_mem>>
    %26 = tpu.memref_squeeze %25 : memref<1x1x!tpu.dma_semaphore, #tpu.memory_space<semaphore_mem>> -> memref<!tpu.dma_semaphore, #tpu.memory_space<semaphore_mem>>
    tpu.wait_dma2 semaphore(%26 : memref<!tpu.dma_semaphore, #tpu.memory_space<semaphore_mem>>) src(%22 : memref<1x128xf32, #tpu.memory_space<any>>) dst(%24 : memref<1x128xf32, #tpu.memory_space<vmem>>)
    %c2_i32_18 = arith.constant 2 : i32
    %c0_i32_19 = arith.constant 0 : i32
    %c0_i32_20 = arith.constant 0 : i32
    %27 = tpu.memref_slice %arg2[%c0_i32_19, %c0_i32_20] : memref<65x128xf32, #tpu.memory_space<any>> -> memref<1x128xf32, #tpu.memory_space<any>>
    %c2_i32_21 = arith.constant 2 : i32
    %c0_i32_22 = arith.constant 0 : i32
    %28 = tpu.memref_slice %arg4[%9, %c2_i32_21, %c0_i32_22] : memref<2x8x128xf32, #tpu.memory_space<vmem>> -> memref<1x1x128xf32, #tpu.memory_space<vmem>>
    %29 = tpu.memref_squeeze %28 : memref<1x1x128xf32, #tpu.memory_space<vmem>> -> memref<1x128xf32, #tpu.memory_space<vmem>>
    %30 = tpu.memref_slice %arg5[%9, %c2_i32_18] : memref<2x8x!tpu.dma_semaphore, #tpu.memory_space<semaphore_mem>> -> memref<1x1x!tpu.dma_semaphore, #tpu.memory_space<semaphore_mem>>
    %31 = tpu.memref_squeeze %30 : memref<1x1x!tpu.dma_semaphore, #tpu.memory_space<semaphore_mem>> -> memref<!tpu.dma_semaphore, #tpu.memory_space<semaphore_mem>>
    tpu.wait_dma2 semaphore(%31 : memref<!tpu.dma_semaphore, #tpu.memory_space<semaphore_mem>>) src(%27 : memref<1x128xf32, #tpu.memory_space<any>>) dst(%29 : memref<1x128xf32, #tpu.memory_space<vmem>>)
    %c3_i32 = arith.constant 3 : i32
    %c0_i32_23 = arith.constant 0 : i32
    %c0_i32_24 = arith.constant 0 : i32
    %32 = tpu.memref_slice %arg2[%c0_i32_23, %c0_i32_24] : memref<65x128xf32, #tpu.memory_space<any>> -> memref<1x128xf32, #tpu.memory_space<any>>
    %c3_i32_25 = arith.constant 3 : i32
    %c0_i32_26 = arith.constant 0 : i32
    %33 = tpu.memref_slice %arg4[%9, %c3_i32_25, %c0_i32_26] : memref<2x8x128xf32, #tpu.memory_space<vmem>> -> memref<1x1x128xf32, #tpu.memory_space<vmem>>
    %34 = tpu.memref_squeeze %33 : memref<1x1x128xf32, #tpu.memory_space<vmem>> -> memref<1x128xf32, #tpu.memory_space<vmem>>
    %35 = tpu.memref_slice %arg5[%9, %c3_i32] : memref<2x8x!tpu.dma_semaphore, #tpu.memory_space<semaphore_mem>> -> memref<1x1x!tpu.dma_semaphore, #tpu.memory_space<semaphore_mem>>
    %36 = tpu.memref_squeeze %35 : memref<1x1x!tpu.dma_semaphore, #tpu.memory_space<semaphore_mem>> -> memref<!tpu.dma_semaphore, #tpu.memory_space<semaphore_mem>>
    tpu.wait_dma2 semaphore(%36 : memref<!tpu.dma_semaphore, #tpu.memory_space<semaphore_mem>>) src(%32 : memref<1x128xf32, #tpu.memory_space<any>>) dst(%34 : memref<1x128xf32, #tpu.memory_space<vmem>>)
    %c4_i32 = arith.constant 4 : i32
    %c0_i32_27 = arith.constant 0 : i32
    %c0_i32_28 = arith.constant 0 : i32
    %37 = tpu.memref_slice %arg2[%c0_i32_27, %c0_i32_28] : memref<65x128xf32, #tpu.memory_space<any>> -> memref<1x128xf32, #tpu.memory_space<any>>
    %c4_i32_29 = arith.constant 4 : i32
    %c0_i32_30 = arith.constant 0 : i32
    %38 = tpu.memref_slice %arg4[%9, %c4_i32_29, %c0_i32_30] : memref<2x8x128xf32, #tpu.memory_space<vmem>> -> memref<1x1x128xf32, #tpu.memory_space<vmem>>
    %39 = tpu.memref_squeeze %38 : memref<1x1x128xf32, #tpu.memory_space<vmem>> -> memref<1x128xf32, #tpu.memory_space<vmem>>
    %40 = tpu.memref_slice %arg5[%9, %c4_i32] : memref<2x8x!tpu.dma_semaphore, #tpu.memory_space<semaphore_mem>> -> memref<1x1x!tpu.dma_semaphore, #tpu.memory_space<semaphore_mem>>
    %41 = tpu.memref_squeeze %40 : memref<1x1x!tpu.dma_semaphore, #tpu.memory_space<semaphore_mem>> -> memref<!tpu.dma_semaphore, #tpu.memory_space<semaphore_mem>>
    tpu.wait_dma2 semaphore(%41 : memref<!tpu.dma_semaphore, #tpu.memory_space<semaphore_mem>>) src(%37 : memref<1x128xf32, #tpu.memory_space<any>>) dst(%39 : memref<1x128xf32, #tpu.memory_space<vmem>>)
    %c5_i32 = arith.constant 5 : i32
    %c0_i32_31 = arith.constant 0 : i32
    %c0_i32_32 = arith.constant 0 : i32
    %42 = tpu.memref_slice %arg2[%c0_i32_31, %c0_i32_32] : memref<65x128xf32, #tpu.memory_space<any>> -> memref<1x128xf32, #tpu.memory_space<any>>
    %c5_i32_33 = arith.constant 5 : i32
    %c0_i32_34 = arith.constant 0 : i32
    %43 = tpu.memref_slice %arg4[%9, %c5_i32_33, %c0_i32_34] : memref<2x8x128xf32, #tpu.memory_space<vmem>> -> memref<1x1x128xf32, #tpu.memory_space<vmem>>
    %44 = tpu.memref_squeeze %43 : memref<1x1x128xf32, #tpu.memory_space<vmem>> -> memref<1x128xf32, #tpu.memory_space<vmem>>
    %45 = tpu.memref_slice %arg5[%9, %c5_i32] : memref<2x8x!tpu.dma_semaphore, #tpu.memory_space<semaphore_mem>> -> memref<1x1x!tpu.dma_semaphore, #tpu.memory_space<semaphore_mem>>
    %46 = tpu.memref_squeeze %45 : memref<1x1x!tpu.dma_semaphore, #tpu.memory_space<semaphore_mem>> -> memref<!tpu.dma_semaphore, #tpu.memory_space<semaphore_mem>>
    tpu.wait_dma2 semaphore(%46 : memref<!tpu.dma_semaphore, #tpu.memory_space<semaphore_mem>>) src(%42 : memref<1x128xf32, #tpu.memory_space<any>>) dst(%44 : memref<1x128xf32, #tpu.memory_space<vmem>>)
    %c6_i32 = arith.constant 6 : i32
    %c0_i32_35 = arith.constant 0 : i32
    %c0_i32_36 = arith.constant 0 : i32
    %47 = tpu.memref_slice %arg2[%c0_i32_35, %c0_i32_36] : memref<65x128xf32, #tpu.memory_space<any>> -> memref<1x128xf32, #tpu.memory_space<any>>
    %c6_i32_37 = arith.constant 6 : i32
    %c0_i32_38 = arith.constant 0 : i32
    %48 = tpu.memref_slice %arg4[%9, %c6_i32_37, %c0_i32_38] : memref<2x8x128xf32, #tpu.memory_space<vmem>> -> memref<1x1x128xf32, #tpu.memory_space<vmem>>
    %49 = tpu.memref_squeeze %48 : memref<1x1x128xf32, #tpu.memory_space<vmem>> -> memref<1x128xf32, #tpu.memory_space<vmem>>
    %50 = tpu.memref_slice %arg5[%9, %c6_i32] : memref<2x8x!tpu.dma_semaphore, #tpu.memory_space<semaphore_mem>> -> memref<1x1x!tpu.dma_semaphore, #tpu.memory_space<semaphore_mem>>
    %51 = tpu.memref_squeeze %50 : memref<1x1x!tpu.dma_semaphore, #tpu.memory_space<semaphore_mem>> -> memref<!tpu.dma_semaphore, #tpu.memory_space<semaphore_mem>>
    tpu.wait_dma2 semaphore(%51 : memref<!tpu.dma_semaphore, #tpu.memory_space<semaphore_mem>>) src(%47 : memref<1x128xf32, #tpu.memory_space<any>>) dst(%49 : memref<1x128xf32, #tpu.memory_space<vmem>>)
    %c7_i32 = arith.constant 7 : i32
    %c0_i32_39 = arith.constant 0 : i32
    %c0_i32_40 = arith.constant 0 : i32
    %52 = tpu.memref_slice %arg2[%c0_i32_39, %c0_i32_40] : memref<65x128xf32, #tpu.memory_space<any>> -> memref<1x128xf32, #tpu.memory_space<any>>
    %c7_i32_41 = arith.constant 7 : i32
    %c0_i32_42 = arith.constant 0 : i32
    %53 = tpu.memref_slice %arg4[%9, %c7_i32_41, %c0_i32_42] : memref<2x8x128xf32, #tpu.memory_space<vmem>> -> memref<1x1x128xf32, #tpu.memory_space<vmem>>
    %54 = tpu.memref_squeeze %53 : memref<1x1x128xf32, #tpu.memory_space<vmem>> -> memref<1x128xf32, #tpu.memory_space<vmem>>
    %55 = tpu.memref_slice %arg5[%9, %c7_i32] : memref<2x8x!tpu.dma_semaphore, #tpu.memory_space<semaphore_mem>> -> memref<1x1x!tpu.dma_semaphore, #tpu.memory_space<semaphore_mem>>
    %56 = tpu.memref_squeeze %55 : memref<1x1x!tpu.dma_semaphore, #tpu.memory_space<semaphore_mem>> -> memref<!tpu.dma_semaphore, #tpu.memory_space<semaphore_mem>>
    tpu.wait_dma2 semaphore(%56 : memref<!tpu.dma_semaphore, #tpu.memory_space<semaphore_mem>>) src(%52 : memref<1x128xf32, #tpu.memory_space<any>>) dst(%54 : memref<1x128xf32, #tpu.memory_space<vmem>>)
    %57 = arith.index_cast %9 : i32 to index
    %c0 = arith.constant 0 : index
    %c0_43 = arith.constant 0 : index
    %58 = vector.load %arg4[%57, %c0, %c0_43] : memref<2x8x128xf32, #tpu.memory_space<vmem>>, vector<1x8x128xf32>
    %59 = vector.shape_cast %58 : vector<1x8x128xf32> to vector<8x128xf32>
    %c0_44 = arith.constant 0 : index
    %c0_45 = arith.constant 0 : index
    %c0_46 = arith.constant 0 : index
    %60 = vector.load %arg3[%c0_44, %c0_45, %c0_46] : memref<1x8x128xf32, #tpu.memory_space<vmem>>, vector<1x8x128xf32>
    %61 = vector.shape_cast %60 : vector<1x8x128xf32> to vector<8x128xf32>
    %62 = vector.shape_cast %59 : vector<8x128xf32> to vector<1x8x128xf32>
    tpu.vector_store %arg3[%c0_44, %c0_45, %c0_46], %62 {strides = array<i32>} : memref<1x8x128xf32, #tpu.memory_space<vmem>>, vector<1x8x128xf32>,
    return
  }
  func.func @transform_1(%arg0: i32, %arg1: memref<16xi32, #tpu.memory_space<smem>>) -> (i32, i32, i32) {
    %c0_i32 = arith.constant 0 : i32
    %c0_i32_0 = arith.constant 0 : i32
    %c0_i32_1 = arith.constant 0 : i32
    return %arg0, %c0_i32, %c0_i32_0 : i32, i32, i32
  }
}

</mosaic_0001>

<llo_original>
// kernel: tpu_custom_call.1
$region0: #{tpu_custom_call.1}
  #allocation0 [shape = 'u32[]', space=smem, size = 0x4, offset = 0x4, fixed_abs, tag = 'smem constant byte address 0x4 - core index']
  #allocation1 [shape = 'u32[144,128]{1,0:T(1,128)}', space=vmem, size = 0x12000, scoped, tag = 'internal scratch']
  #allocation2 [shape = 'f32[2,8,128]{2,1,0:T(8,128)}', space=vmem, size = 0x2000, scoped, tag = 'scratch operand']
  #allocation3 [shape = 's32[16]{0}', space=sflag, size = 0x40, scoped, tag = 'scratch operand']
  #allocation4 [shape = 's32[1]{0}', space=sflag, size = 0x4, scoped, tag = 'scoped memory for tpu_custom_call.1']
  #allocation5 [shape = 'u8[512]{0}', space=smem, size = 0x200, scoped, tag = 'prefetched SMEM operand 0']
  #allocation8 [shape = 's32[]', space=sflag, size = 0x4, offset = 0, fixed_abs, tag = 'sflag constant byte address 0x0 - dummy sync flag']
  #allocation9 [shape = 's32[]', space=sflag, size = 0x4, offset = 0, fixed_abs, tag = 'sflag constant byte address 0x0 - dummy sync flag']
  #allocation10 [shape = 'u32[]', space=smem, size = 0x4, offset = 0x44, fixed_abs, tag = 'smem constant byte address 0x44 - assertion arg 0']
  #allocation11 [shape = 'u32[]', space=smem, size = 0x4, offset = 0x48, fixed_abs, tag = 'smem constant byte address 0x48 - assertion arg 1']
  #allocation12 [shape = 's32[]', space=sflag, size = 0x4, offset = 0, fixed_abs, tag = 'sflag constant byte address 0x0 - dummy sync flag']
  #allocation13 [shape = 's32[]', space=sflag, size = 0x4, offset = 0, fixed_abs, tag = 'sflag constant byte address 0x0 - dummy sync flag']
  #allocation14 [shape = 's32[]', space=sflag, size = 0x4, offset = 0, fixed_abs, tag = 'sflag constant byte address 0x0 - dummy sync flag']
  #allocation15 [shape = 's32[]', space=sflag, size = 0x4, offset = 0, fixed_abs, tag = 'sflag constant byte address 0x0 - dummy sync flag']
  #allocation16 [shape = 's32[]', space=sflag, size = 0x4, offset = 0, fixed_abs, tag = 'sflag constant byte address 0x0 - dummy sync flag']
  #allocation17 [shape = 's32[]', space=sflag, size = 0x4, offset = 0, fixed_abs, tag = 'sflag constant byte address 0x0 - dummy sync flag']
  #allocation18 [shape = 's32[]', space=sflag, size = 0x4, offset = 0, fixed_abs, tag = 'sflag constant byte address 0x0 - dummy sync flag']
  #allocation19 [shape = 's32[]', space=sflag, size = 0x4, offset = 0, fixed_abs, tag = 'sflag constant byte address 0x0 - dummy sync flag']
  #allocation20 [shape = 's32[]', space=sflag, size = 0x4, offset = 0, fixed_abs, tag = 'sflag constant byte address 0x0 - dummy sync flag']
  #allocation21 [shape = 's32[]', space=sflag, size = 0x4, offset = 0, fixed_abs, tag = 'sflag constant byte address 0x0 - dummy sync flag']
  #allocation22 [shape = 's32[]', space=sflag, size = 0x4, offset = 0, fixed_abs, tag = 'sflag constant byte address 0x0 - dummy sync flag']
  #allocation23 [shape = 's32[]', space=sflag, size = 0x4, offset = 0, fixed_abs, tag = 'sflag constant byte address 0x0 - dummy sync flag']
  #allocation24 [shape = 's32[]', space=sflag, size = 0x4, offset = 0, fixed_abs, tag = 'sflag constant byte address 0x0 - dummy sync flag']
  #allocation25 [shape = 's32[]', space=sflag, size = 0x4, offset = 0, fixed_abs, tag = 'sflag constant byte address 0x0 - dummy sync flag']
  #allocation26 [shape = 's32[]', space=sflag, size = 0x4, offset = 0, fixed_abs, tag = 'sflag constant byte address 0x0 - dummy sync flag']
  #allocation27 [shape = 's32[]', space=sflag, size = 0x4, offset = 0, fixed_abs, tag = 'sflag constant byte address 0x0 - dummy sync flag']
  #allocation28 [shape = 's32[]', space=sflag, size = 0x4, offset = 0, fixed_abs, tag = 'sflag constant byte address 0x0 - dummy sync flag']
  #allocation29 [shape = 's32[]', space=sflag, size = 0x4, offset = 0, fixed_abs, tag = 'sflag constant byte address 0x0 - dummy sync flag']
  #allocation30 [shape = 's32[]', space=sflag, size = 0x4, offset = 0, fixed_abs, tag = 'sflag constant byte address 0x0 - dummy sync flag']
  #allocation31 [shape = 's32[]', space=sflag, size = 0x4, offset = 0, fixed_abs, tag = 'sflag constant byte address 0x0 - dummy sync flag']
  #allocation32 [shape = 's32[]', space=sflag, size = 0x4, offset = 0, fixed_abs, tag = 'sflag constant byte address 0x0 - dummy sync flag']
  #allocation33 [shape = 's32[]', space=sflag, size = 0x4, offset = 0, fixed_abs, tag = 'sflag constant byte address 0x0 - dummy sync flag']
  #allocation34 [shape = 's32[]', space=sflag, size = 0x4, offset = 0, fixed_abs, tag = 'sflag constant byte address 0x0 - dummy sync flag']
  #allocation35 [shape = 's32[]', space=sflag, size = 0x4, offset = 0, fixed_abs, tag = 'sflag constant byte address 0x0 - dummy sync flag']
  #allocation36 [shape = 's32[]', space=sflag, size = 0x4, offset = 0, fixed_abs, tag = 'sflag constant byte address 0x0 - dummy sync flag']
  #allocation37 [shape = 's32[]', space=sflag, size = 0x4, offset = 0, fixed_abs, tag = 'sflag constant byte address 0x0 - dummy sync flag']
  #allocation38 [shape = 's32[]', space=sflag, size = 0x4, offset = 0, fixed_abs, tag = 'sflag constant byte address 0x0 - dummy sync flag']
  #allocation39 [shape = 's32[]', space=sflag, size = 0x4, offset = 0, fixed_abs, tag = 'sflag constant byte address 0x0 - dummy sync flag']
  #allocation40 [shape = 's32[]', space=sflag, size = 0x4, offset = 0, fixed_abs, tag = 'sflag constant byte address 0x0 - dummy sync flag']
  #allocation41 [shape = 's32[]', space=sflag, size = 0x4, offset = 0, fixed_abs, tag = 'sflag constant byte address 0x0 - dummy sync flag']
  %s0 = inlined_call_operand.hbm [shape: s32[16], index: 0, kind: input, shape index: {}]
  %s1 = inlined_call_operand.hbm [shape: f32[65,128], index: 1, kind: input, shape index: {}]
  %s2 = inlined_call_operand.hbm [shape: f32[2,8,128], index: 2, kind: output, shape index: {}]
  %s3 = sld [smem:[#allocation0]]
  $region97: #{tpu_custom_call.1} parent=0
    _
  %s5 = ssub.s32 1, %s3
  %s6 = scalar_select 0, %s5, %s3
  %8 = dma.hbm_to_smem %s0, 16, [#allocation5], [#allocation4]
  %9 = dma.done [#allocation4], 16
  %10 = sfence
  $region1: #{tpu_custom_call.1} parent=0
    #allocation6 [shape = 'u8[8192]{0}', space=vmem, size = 0x2000, scoped, tag = 'output window, operand 0']
    #allocation7 [shape = 's32[2]{0}', space=sflag, size = 0x8, scoped, tag = 'scoped memory for tpu_custom_call.1']
    %11 = vsyncpa [#allocation7], 0
    %s12 = scalar_lea.sflag [#allocation7], 1
    %13 = vsyncpa %s12, 0
    loop: start=0, step=1, limit=3
    $region2: #{tpu_custom_call.1} parent=1 // loop_pre_header
      _
    $region3: #{tpu_custom_call.1} parent=1 // loop_header
      %s15 = sphi 0, %s19
      %p16 = scmp.ge.s32.totalorder %s15, 3
      %s24 = sphi 0, %s26
      %s27 = sphi 0, %s24
      %s37 = sphi 0, %s27
    $region4: #{tpu_custom_call.1} parent=1 // loop_header_branch
      %18 = sbr.rel (%p16) target = $region8
    $region5: #{tpu_custom_call.1} parent=1 // loop_body
      %s20 = ssub.s32 %s15, 1
      %s21 = sadd.s32 %s15, 1
      %s22 = ssub.s32 %s15, %s21
      %p23 = scmp.eq.s32.totalorder %s22, 0
      %s25 = sadd.s32 %s24, 1
      %s26 = scalar_select %p23, %s24, %s25
      %p28 = pneg %p23
      %p29 = scmp.eq.s32.totalorder %s15, 1
      %p30 = por %p28, %p29
      %p31 = scmp.ne.s32.totalorder %s24, %s27
      %p32 = scmp.eq.s32.totalorder %s15, 0
      %p33 = por %p31, %p32
      %p34 = scmp.ne.s32.totalorder %s24, %s27
      %p35 = scmp.eq.s32.totalorder %s20, 1
      %p36 = por %p34, %p35
      %p38 = scmp.ne.s32.totalorder %s27, %s37
      %p39 = scmp.eq.s32.totalorder %s20, 0
      %p40 = por %p38, %p39
      %p41 = scmp.lt.s32.totalorder %s15, 2
      // Predicated region
      $region9: #{tpu_custom_call.1} parent=5 // pred_check
        %p42 = pneg %p41
      $region10: #{tpu_custom_call.1} parent=5 // pred_check_branch
        %44 = sbr.rel (%p42) target = $region12
      $region11: #{tpu_custom_call.1} parent=5 // pred_region
        %p45 = pneg %p33
        %p46 = pneg %p30
        %s47 = sand.u32 %s24, 1
        %s48 = scalar_lea.sflag [#allocation7], %s47
        %s49 = sand.u32 %s24, 1
        %s50 = smul.addr %s49, 8
        %s51 = scalar_lea.vmem [#allocation6], %s50
        %p52 = scmp.lt.s32.totalorder %s15, 0
        %s53 = ssub.s32 0, %s15
        %s54 = scalar_select %p52, %s53, %s15
        %s55 = sand.u32 %s54, 1
        %s56 = ssub.s32 0, %s55
        %s57 = scalar_select %p52, %s56, %s55
        %p58 = scmp.ne.s32.totalorder %s57, 0
        %p59 = scmp.lt.s32.totalorder %s57, 0
        %p60 = pnand %p59, %p58
        %p61 = pneg %p60
        %s62 = sadd.s32 %s57, 2
        %s63 = scalar_select %p61, %s62, %s57
        %p64 = scmp.eq.s32.totalorder %s15, 0
        // Predicated region
        $region13: #{tpu_custom_call.1} parent=11 // pred_check
          %p65 = pneg %p64
        $region14: #{tpu_custom_call.1} parent=11 // pred_check_branch
          %67 = sbr.rel (%p65) target = $region16
        $region15: #{tpu_custom_call.1} parent=11 // pred_region
          %s68 = sld [smem:[#allocation5]]
          %p69 = scmp.gt.s32.totalorder %s68, 0
          %s70 = scalar_select %p69, %s68, 0
          %p71 = scmp.lt.s32.totalorder %s70, 64
          %s72 = scalar_select %p71, %s70, 64
          %s73 = smul.addr %s72, 16
          %s74 = scalar_lea.hbm %s1, %s73
          // Predicated region
          $region17: #{tpu_custom_call.1} parent=15 // pred_check
            _
          $region18: #{tpu_custom_call.1} parent=15 // pred_check_branch
            %76 = sbr.rel target = $region20
          $region19: #{tpu_custom_call.1} parent=15 // pred_region
            %77 = sst [smem:[#allocation10]] [#allocation9]
            %78 = sst [smem:[#allocation11]] [#allocation8]
          $region20: #{tpu_custom_call.1} parent=15 // pred_fallthru
            _
          %80 = shalt.err (0)
          %s82 = sshll.u32 [#allocation2], 4
          %s83 = int_to_ptr.vmem [resolvable:$true] %s82
          %85 = dma.hbm_to_vmem [thread:$0]  %s74, 16, %s83, [#allocation3]
          %s86 = sld [smem:[#allocation5 + $0x1]]
          %p87 = scmp.gt.s32.totalorder %s86, 0
          %s88 = scalar_select %p87, %s86, 0
          %p89 = scmp.lt.s32.totalorder %s88, 64
          %s90 = scalar_select %p89, %s88, 64
          %s91 = smul.addr %s90, 16
          %s92 = scalar_lea.hbm %s1, %s91
          %s93 = scalar_lea.vmem [#allocation2], 1
          %s94 = scalar_lea.sflag [#allocation3], 1
          // Predicated region
          $region21: #{tpu_custom_call.1} parent=15 // pred_check
            _
          $region22: #{tpu_custom_call.1} parent=15 // pred_check_branch
            %96 = sbr.rel target = $region24
          $region23: #{tpu_custom_call.1} parent=15 // pred_region
            %97 = sst [smem:[#allocation10]] [#allocation13]
            %98 = sst [smem:[#allocation11]] [#allocation12]
          $region24: #{tpu_custom_call.1} parent=15 // pred_fallthru
            _
          %100 = shalt.err (0)
          %s102 = sshll.u32 %s93, 4
          %s103 = int_to_ptr.vmem [resolvable:$true] %s102
          %105 = dma.hbm_to_vmem [thread:$0]  %s92, 16, %s103, %s94
          %s106 = sld [smem:[#allocation5 + $0x2]]
          %p107 = scmp.gt.s32.totalorder %s106, 0
          %s108 = scalar_select %p107, %s106, 0
          %p109 = scmp.lt.s32.totalorder %s108, 64
          %s110 = scalar_select %p109, %s108, 64
          %s111 = smul.addr %s110, 16
          %s112 = scalar_lea.hbm %s1, %s111
          %s113 = scalar_lea.vmem [#allocation2], 2
          %s114 = scalar_lea.sflag [#allocation3], 2
          // Predicated region
          $region25: #{tpu_custom_call.1} parent=15 // pred_check
            _
          $region26: #{tpu_custom_call.1} parent=15 // pred_check_branch
            %116 = sbr.rel target = $region28
          $region27: #{tpu_custom_call.1} parent=15 // pred_region
            %117 = sst [smem:[#allocation10]] [#allocation15]
            %118 = sst [smem:[#allocation11]] [#allocation14]
          $region28: #{tpu_custom_call.1} parent=15 // pred_fallthru
            _
          %120 = shalt.err (0)
          %s122 = sshll.u32 %s113, 4
          %s123 = int_to_ptr.vmem [resolvable:$true] %s122
          %125 = dma.hbm_to_vmem [thread:$0]  %s112, 16, %s123, %s114
          %s126 = sld [smem:[#allocation5 + $0x3]]
          %p127 = scmp.gt.s32.totalorder %s126, 0
          %s128 = scalar_select %p127, %s126, 0
          %p129 = scmp.lt.s32.totalorder %s128, 64
          %s130 = scalar_select %p129, %s128, 64
          %s131 = smul.addr %s130, 16
          %s132 = scalar_lea.hbm %s1, %s131
          %s133 = scalar_lea.vmem [#allocation2], 3
          %s134 = scalar_lea.sflag [#allocation3], 3
          // Predicated region
          $region29: #{tpu_custom_call.1} parent=15 // pred_check
            _
          $region30: #{tpu_custom_call.1} parent=15 // pred_check_branch
            %136 = sbr.rel target = $region32
          $region31: #{tpu_custom_call.1} parent=15 // pred_region
            %137 = sst [smem:[#allocation10]] [#allocation17]
            %138 = sst [smem:[#allocation11]] [#allocation16]
          $region32: #{tpu_custom_call.1} parent=15 // pred_fallthru
            _
          %140 = shalt.err (0)
          %s142 = sshll.u32 %s133, 4
          %s143 = int_to_ptr.vmem [resolvable:$true] %s142
          %145 = dma.hbm_to_vmem [thread:$0]  %s132, 16, %s143, %s134
          %s146 = sld [smem:[#allocation5 + $0x4]]
          %p147 = scmp.gt.s32.totalorder %s146, 0
          %s148 = scalar_select %p147, %s146, 0
          %p149 = scmp.lt.s32.totalorder %s148, 64
          %s150 = scalar_select %p149, %s148, 64
          %s151 = smul.addr %s150, 16
          %s152 = scalar_lea.hbm %s1, %s151
          %s153 = scalar_lea.vmem [#allocation2], 4
          %s154 = scalar_lea.sflag [#allocation3], 4
          // Predicated region
          $region33: #{tpu_custom_call.1} parent=15 // pred_check
            _
          $region34: #{tpu_custom_call.1} parent=15 // pred_check_branch
            %156 = sbr.rel target = $region36
          $region35: #{tpu_custom_call.1} parent=15 // pred_region
            %157 = sst [smem:[#allocation10]] [#allocation19]
            %158 = sst [smem:[#allocation11]] [#allocation18]
          $region36: #{tpu_custom_call.1} parent=15 // pred_fallthru
            _
          %160 = shalt.err (0)
          %s162 = sshll.u32 %s153, 4
          %s163 = int_to_ptr.vmem [resolvable:$true] %s162
          %165 = dma.hbm_to_vmem [thread:$0]  %s152, 16, %s163, %s154
          %s166 = sld [smem:[#allocation5 + $0x5]]
          %p167 = scmp.gt.s32.totalorder %s166, 0
          %s168 = scalar_select %p167, %s166, 0
          %p169 = scmp.lt.s32.totalorder %s168, 64
          %s170 = scalar_select %p169, %s168, 64
          %s171 = smul.addr %s170, 16
          %s172 = scalar_lea.hbm %s1, %s171
          %s173 = scalar_lea.vmem [#allocation2], 5
          %s174 = scalar_lea.sflag [#allocation3], 5
          // Predicated region
          $region37: #{tpu_custom_call.1} parent=15 // pred_check
            _
          $region38: #{tpu_custom_call.1} parent=15 // pred_check_branch
            %176 = sbr.rel target = $region40
          $region39: #{tpu_custom_call.1} parent=15 // pred_region
            %177 = sst [smem:[#allocation10]] [#allocation21]
            %178 = sst [smem:[#allocation11]] [#allocation20]
          $region40: #{tpu_custom_call.1} parent=15 // pred_fallthru
            _
          %180 = shalt.err (0)
          %s182 = sshll.u32 %s173, 4
          %s183 = int_to_ptr.vmem [resolvable:$true] %s182
          %185 = dma.hbm_to_vmem [thread:$0]  %s172, 16, %s183, %s174
          %s186 = sld [smem:[#allocation5 + $0x6]]
          %p187 = scmp.gt.s32.totalorder %s186, 0
          %s188 = scalar_select %p187, %s186, 0
          %p189 = scmp.lt.s32.totalorder %s188, 64
          %s190 = scalar_select %p189, %s188, 64
          %s191 = smul.addr %s190, 16
          %s192 = scalar_lea.hbm %s1, %s191
          %s193 = scalar_lea.vmem [#allocation2], 6
          %s194 = scalar_lea.sflag [#allocation3], 6
          // Predicated region
          $region41: #{tpu_custom_call.1} parent=15 // pred_check
            _
          $region42: #{tpu_custom_call.1} parent=15 // pred_check_branch
            %196 = sbr.rel target = $region44
          $region43: #{tpu_custom_call.1} parent=15 // pred_region
            %197 = sst [smem:[#allocation10]] [#allocation23]
            %198 = sst [smem:[#allocation11]] [#allocation22]
          $region44: #{tpu_custom_call.1} parent=15 // pred_fallthru
            _
          %200 = shalt.err (0)
          %s202 = sshll.u32 %s193, 4
          %s203 = int_to_ptr.vmem [resolvable:$true] %s202
          %205 = dma.hbm_to_vmem [thread:$0]  %s192, 16, %s203, %s194
          %s206 = sld [smem:[#allocation5 + $0x7]]
          %p207 = scmp.gt.s32.totalorder %s206, 0
          %s208 = scalar_select %p207, %s206, 0
          %p209 = scmp.lt.s32.totalorder %s208, 64
          %s210 = scalar_select %p209, %s208, 64
          %s211 = smul.addr %s210, 16
          %s212 = scalar_lea.hbm %s1, %s211
          %s213 = scalar_lea.vmem [#allocation2], 7
          %s214 = scalar_lea.sflag [#allocation3], 7
          // Predicated region
          $region45: #{tpu_custom_call.1} parent=15 // pred_check
            _
          $region46: #{tpu_custom_call.1} parent=15 // pred_check_branch
            %216 = sbr.rel target = $region48
          $region47: #{tpu_custom_call.1} parent=15 // pred_region
            %217 = sst [smem:[#allocation10]] [#allocation25]
            %218 = sst [smem:[#allocation11]] [#allocation24]
          $region48: #{tpu_custom_call.1} parent=15 // pred_fallthru
            _
          %220 = shalt.err (0)
          %s222 = sshll.u32 %s213, 4
          %s223 = int_to_ptr.vmem [resolvable:$true] %s222
          %225 = dma.hbm_to_vmem [thread:$0]  %s212, 16, %s223, %s214
        $region16: #{tpu_custom_call.1} parent=11 // pred_fallthru
          _
        %s226 = sadd.s32 %s15, 1
        %p227 = scmp.lt.s32.totalorder %s226, 2
        // Predicated region
        $region49: #{tpu_custom_call.1} parent=11 // pred_check
          %p228 = pneg %p227
        $region50: #{tpu_custom_call.1} parent=11 // pred_check_branch
          %230 = sbr.rel (%p228) target = $region52
        $region51: #{tpu_custom_call.1} parent=11 // pred_region
          %s231 = ssub.s32 1, %s63
          %s232 = smul.u32 %s226, 8
          %s233 = sld [smem:[#allocation5 + %s232]]
          %p234 = scmp.gt.s32.totalorder %s233, 0
          %s235 = scalar_select %p234, %s233, 0
          %p236 = scmp.lt.s32.totalorder %s235, 64
          %s237 = scalar_select %p236, %s235, 64
          %s238 = smul.addr %s237, 16
          %s239 = scalar_lea.hbm %s1, %s238
          %s240 = smul.u32 %s231, 8
          %s241 = scalar_lea.vmem [#allocation2], %s240
          %s242 = scalar_lea.sflag [#allocation3], %s240
          // Predicated region
          $region53: #{tpu_custom_call.1} parent=51 // pred_check
            _
          $region54: #{tpu_custom_call.1} parent=51 // pred_check_branch
            %244 = sbr.rel target = $region56
          $region55: #{tpu_custom_call.1} parent=51 // pred_region
            %245 = sst [smem:[#allocation10]] [#allocation27]
            %246 = sst [smem:[#allocation11]] [#allocation26]
          $region56: #{tpu_custom_call.1} parent=51 // pred_fallthru
            _
          %248 = shalt.err (0)
          %s250 = sshll.u32 %s241, 4
          %s251 = int_to_ptr.vmem [resolvable:$true] %s250
          %253 = dma.hbm_to_vmem [thread:$0]  %s239, 16, %s251, %s242
          %s254 = sadd.s32 %s232, 1
          %s255 = sld [smem:[#allocation5 + %s254]]
          %p256 = scmp.gt.s32.totalorder %s255, 0
          %s257 = scalar_select %p256, %s255, 0
          %p258 = scmp.lt.s32.totalorder %s257, 64
          %s259 = scalar_select %p258, %s257, 64
          %s260 = smul.addr %s259, 16
          %s261 = scalar_lea.hbm %s1, %s260
          %s262 = sadd.s32 1, %s240
          %s263 = scalar_lea.vmem [#allocation2], %s262
          %s264 = scalar_lea.sflag [#allocation3], %s262
          // Predicated region
          $region57: #{tpu_custom_call.1} parent=51 // pred_check
            _
          $region58: #{tpu_custom_call.1} parent=51 // pred_check_branch
            %266 = sbr.rel target = $region60
          $region59: #{tpu_custom_call.1} parent=51 // pred_region
            %267 = sst [smem:[#allocation10]] [#allocation29]
            %268 = sst [smem:[#allocation11]] [#allocation28]
          $region60: #{tpu_custom_call.1} parent=51 // pred_fallthru
            _
          %270 = shalt.err (0)
          %s272 = sshll.u32 %s263, 4
          %s273 = int_to_ptr.vmem [resolvable:$true] %s272
          %275 = dma.hbm_to_vmem [thread:$0]  %s261, 16, %s273, %s264
          %s276 = sadd.s32 %s232, 2
          %s277 = sld [smem:[#allocation5 + %s276]]
          %p278 = scmp.gt.s32.totalorder %s277, 0
          %s279 = scalar_select %p278, %s277, 0
          %p280 = scmp.lt.s32.totalorder %s279, 64
          %s281 = scalar_select %p280, %s279, 64
          %s282 = smul.addr %s281, 16
          %s283 = scalar_lea.hbm %s1, %s282
          %s284 = sadd.s32 2, %s240
          %s285 = scalar_lea.vmem [#allocation2], %s284
          %s286 = scalar_lea.sflag [#allocation3], %s284
          // Predicated region
          $region61: #{tpu_custom_call.1} parent=51 // pred_check
            _
          $region62: #{tpu_custom_call.1} parent=51 // pred_check_branch
            %288 = sbr.rel target = $region64
          $region63: #{tpu_custom_call.1} parent=51 // pred_region
            %289 = sst [smem:[#allocation10]] [#allocation31]
            %290 = sst [smem:[#allocation11]] [#allocation30]
          $region64: #{tpu_custom_call.1} parent=51 // pred_fallthru
            _
          %292 = shalt.err (0)
          %s294 = sshll.u32 %s285, 4
          %s295 = int_to_ptr.vmem [resolvable:$true] %s294
          %297 = dma.hbm_to_vmem [thread:$0]  %s283, 16, %s295, %s286
          %s298 = sadd.s32 %s232, 3
          %s299 = sld [smem:[#allocation5 + %s298]]
          %p300 = scmp.gt.s32.totalorder %s299, 0
          %s301 = scalar_select %p300, %s299, 0
          %p302 = scmp.lt.s32.totalorder %s301, 64
          %s303 = scalar_select %p302, %s301, 64
          %s304 = smul.addr %s303, 16
          %s305 = scalar_lea.hbm %s1, %s304
          %s306 = sadd.s32 3, %s240
          %s307 = scalar_lea.vmem [#allocation2], %s306
          %s308 = scalar_lea.sflag [#allocation3], %s306
          // Predicated region
          $region65: #{tpu_custom_call.1} parent=51 // pred_check
            _
          $region66: #{tpu_custom_call.1} parent=51 // pred_check_branch
            %310 = sbr.rel target = $region68
          $region67: #{tpu_custom_call.1} parent=51 // pred_region
            %311 = sst [smem:[#allocation10]] [#allocation33]
            %312 = sst [smem:[#allocation11]] [#allocation32]
          $region68: #{tpu_custom_call.1} parent=51 // pred_fallthru
            _
          %314 = shalt.err (0)
          %s316 = sshll.u32 %s307, 4
          %s317 = int_to_ptr.vmem [resolvable:$true] %s316
          %319 = dma.hbm_to_vmem [thread:$0]  %s305, 16, %s317, %s308
          %s320 = sadd.s32 %s232, 4
          %s321 = sld [smem:[#allocation5 + %s320]]
          %p322 = scmp.gt.s32.totalorder %s321, 0
          %s323 = scalar_select %p322, %s321, 0
          %p324 = scmp.lt.s32.totalorder %s323, 64
          %s325 = scalar_select %p324, %s323, 64
          %s326 = smul.addr %s325, 16
          %s327 = scalar_lea.hbm %s1, %s326
          %s328 = sadd.s32 4, %s240
          %s329 = scalar_lea.vmem [#allocation2], %s328
          %s330 = scalar_lea.sflag [#allocation3], %s328
          // Predicated region
          $region69: #{tpu_custom_call.1} parent=51 // pred_check
            _
          $region70: #{tpu_custom_call.1} parent=51 // pred_check_branch
            %332 = sbr.rel target = $region72
          $region71: #{tpu_custom_call.1} parent=51 // pred_region
            %333 = sst [smem:[#allocation10]] [#allocation35]
            %334 = sst [smem:[#allocation11]] [#allocation34]
          $region72: #{tpu_custom_call.1} parent=51 // pred_fallthru
            _
          %336 = shalt.err (0)
          %s338 = sshll.u32 %s329, 4
          %s339 = int_to_ptr.vmem [resolvable:$true] %s338
          %341 = dma.hbm_to_vmem [thread:$0]  %s327, 16, %s339, %s330
          %s342 = sadd.s32 %s232, 5
          %s343 = sld [smem:[#allocation5 + %s342]]
          %p344 = scmp.gt.s32.totalorder %s343, 0
          %s345 = scalar_select %p344, %s343, 0
          %p346 = scmp.lt.s32.totalorder %s345, 64
          %s347 = scalar_select %p346, %s345, 64
          %s348 = smul.addr %s347, 16
          %s349 = scalar_lea.hbm %s1, %s348
          %s350 = sadd.s32 5, %s240
          %s351 = scalar_lea.vmem [#allocation2], %s350
          %s352 = scalar_lea.sflag [#allocation3], %s350
          // Predicated region
          $region73: #{tpu_custom_call.1} parent=51 // pred_check
            _
          $region74: #{tpu_custom_call.1} parent=51 // pred_check_branch
            %354 = sbr.rel target = $region76
          $region75: #{tpu_custom_call.1} parent=51 // pred_region
            %355 = sst [smem:[#allocation10]] [#allocation37]
            %356 = sst [smem:[#allocation11]] [#allocation36]
          $region76: #{tpu_custom_call.1} parent=51 // pred_fallthru
            _
          %358 = shalt.err (0)
          %s360 = sshll.u32 %s351, 4
          %s361 = int_to_ptr.vmem [resolvable:$true] %s360
          %363 = dma.hbm_to_vmem [thread:$0]  %s349, 16, %s361, %s352
          %s364 = sadd.s32 %s232, 6
          %s365 = sld [smem:[#allocation5 + %s364]]
          %p366 = scmp.gt.s32.totalorder %s365, 0
          %s367 = scalar_select %p366, %s365, 0
          %p368 = scmp.lt.s32.totalorder %s367, 64
          %s369 = scalar_select %p368, %s367, 64
          %s370 = smul.addr %s369, 16
          %s371 = scalar_lea.hbm %s1, %s370
          %s372 = sadd.s32 6, %s240
          %s373 = scalar_lea.vmem [#allocation2], %s372
          %s374 = scalar_lea.sflag [#allocation3], %s372
          // Predicated region
          $region77: #{tpu_custom_call.1} parent=51 // pred_check
            _
          $region78: #{tpu_custom_call.1} parent=51 // pred_check_branch
            %376 = sbr.rel target = $region80
          $region79: #{tpu_custom_call.1} parent=51 // pred_region
            %377 = sst [smem:[#allocation10]] [#allocation39]
            %378 = sst [smem:[#allocation11]] [#allocation38]
          $region80: #{tpu_custom_call.1} parent=51 // pred_fallthru
            _
          %380 = shalt.err (0)
          %s382 = sshll.u32 %s373, 4
          %s383 = int_to_ptr.vmem [resolvable:$true] %s382
          %385 = dma.hbm_to_vmem [thread:$0]  %s371, 16, %s383, %s374
          %s386 = sadd.s32 %s232, 7
          %s387 = sld [smem:[#allocation5 + %s386]]
          %p388 = scmp.gt.s32.totalorder %s387, 0
          %s389 = scalar_select %p388, %s387, 0
          %p390 = scmp.lt.s32.totalorder %s389, 64
          %s391 = scalar_select %p390, %s389, 64
          %s392 = smul.addr %s391, 16
          %s393 = scalar_lea.hbm %s1, %s392
          %s394 = sadd.s32 7, %s240
          %s395 = scalar_lea.vmem [#allocation2], %s394
          %s396 = scalar_lea.sflag [#allocation3], %s394
          // Predicated region
          $region81: #{tpu_custom_call.1} parent=51 // pred_check
            _
          $region82: #{tpu_custom_call.1} parent=51 // pred_check_branch
            %398 = sbr.rel target = $region84
          $region83: #{tpu_custom_call.1} parent=51 // pred_region
            %399 = sst [smem:[#allocation10]] [#allocation41]
            %400 = sst [smem:[#allocation11]] [#allocation40]
          $region84: #{tpu_custom_call.1} parent=51 // pred_fallthru
            _
          %402 = shalt.err (0)
          %s404 = sshll.u32 %s395, 4
          %s405 = int_to_ptr.vmem [resolvable:$true] %s404
          %407 = dma.hbm_to_vmem [thread:$0]  %s393, 16, %s405, %s396
        $region52: #{tpu_custom_call.1} parent=11 // pred_fallthru
          _
        %s408 = smul.u32 %s63, 8
        %s409 = scalar_lea.sflag [#allocation3], %s408
        %s410 = smul.u32 1, 1
        %s411 = sshll.u32 %s410, 4
        %412 = dma.done %s409, %s411
        %s413 = sadd.s32 1, %s408
        %s414 = scalar_lea.sflag [#allocation3], %s413
        %s415 = sshll.u32 %s410, 4
        %416 = dma.done %s414, %s415
        %s417 = sadd.s32 2, %s408
        %s418 = scalar_lea.sflag [#allocation3], %s417
        %s419 = sshll.u32 %s410, 4
        %420 = dma.done %s418, %s419
        %s421 = sadd.s32 3, %s408
        %s422 = scalar_lea.sflag [#allocation3], %s421
        %s423 = sshll.u32 %s410, 4
        %424 = dma.done %s422, %s423
        %s425 = sadd.s32 4, %s408
        %s426 = scalar_lea.sflag [#allocation3], %s425
        %s427 = sshll.u32 %s410, 4
        %428 = dma.done %s426, %s427
        %s429 = sadd.s32 5, %s408
        %s430 = scalar_lea.sflag [#allocation3], %s429
        %s431 = sshll.u32 %s410, 4
        %432 = dma.done %s430, %s431
        %s433 = sadd.s32 6, %s408
        %s434 = scalar_lea.sflag [#allocation3], %s433
        %s435 = sshll.u32 %s410, 4
        %436 = dma.done %s434, %s435
        %s437 = sadd.s32 7, %s408
        %s438 = scalar_lea.sflag [#allocation3], %s437
        %s439 = sshll.u32 %s410, 4
        %440 = dma.done %s438, %s439
        %s441 = scalar_lea.vmem [#allocation2], %s408
        %v442 = vld [vmem:[%s441] sm:$0xff]
        %443 = vst [vmem:[%s51] sm:$0xff] %v442
        %s444 = sand.u32 %s24, 1
        %s445 = scalar_lea.sflag [#allocation7], %s444
        %s446 = sand.u32 %s24, 1
        %s447 = smul.addr %s446, 8
        %s448 = scalar_lea.vmem [#allocation6], %s447
        // Predicated region
        $region85: #{tpu_custom_call.1} parent=11 // pred_check
          %p449 = pneg %p30
        $region86: #{tpu_custom_call.1} parent=11 // pred_check_branch
          %451 = sbr.rel (%p449) target = $region88
        $region87: #{tpu_custom_call.1} parent=11 // pred_region
          %s453 = ssub.s32 128, 128
          %454 = vsyncadd %s445, %s453
          %s455 = smul.addr %s15, 128
          %s456 = scalar_lea.hbm %s2, %s455
          %s458 = sshll.u32 %s448, 4
          %s459 = int_to_ptr.vmem [resolvable:$true] %s458
          %461 = dma.vmem_to_hbm [thread:$0]  %s459, 128, %s456, %s445
        $region88: #{tpu_custom_call.1} parent=11 // pred_fallthru
          _
      $region12: #{tpu_custom_call.1} parent=5 // pred_fallthru
        _
      %p462 = scmp.le.s32.totalorder 1, %s15
      // Predicated region
      $region89: #{tpu_custom_call.1} parent=5 // pred_check
        %p463 = pneg %p462
      $region90: #{tpu_custom_call.1} parent=5 // pred_check_branch
        %465 = sbr.rel (%p463) target = $region92
      $region91: #{tpu_custom_call.1} parent=5 // pred_region
        %s466 = ssub.s32 %s15, 1
        // Predicated region
        $region93: #{tpu_custom_call.1} parent=91 // pred_check
          %p467 = pneg %p36
        $region94: #{tpu_custom_call.1} parent=91 // pred_check_branch
          %469 = sbr.rel (%p467) target = $region96
        $region95: #{tpu_custom_call.1} parent=91 // pred_region
          %s470 = sand.u32 %s27, 1
          %s471 = scalar_lea.sflag [#allocation7], %s470
          %s472 = sand.u32 %s27, 1
          %s473 = smul.addr %s472, 8
          %s474 = scalar_lea.vmem [#allocation6], %s473
          %475 = dma.done %s471, 128
        $region96: #{tpu_custom_call.1} parent=91 // pred_fallthru
          _
      $region92: #{tpu_custom_call.1} parent=5 // pred_fallthru
        _
    $region6: #{tpu_custom_call.1} parent=1 // loop_footer
      %s19 = sadd.s32 1, %s15
    $region7: #{tpu_custom_call.1} parent=1 // loop_footer_branch
      %14 = sbr.rel target = $region3
    $region8: #{tpu_custom_call.1} parent=1 // loop_exit
      _
    %476 = vsyncpa [#allocation7], 1
    %s477 = scalar_lea.sflag [#allocation7], 1
    %478 = vsyncpa %s477, 1
  %479 = vsyncmov [#allocation3]
  %s480 = vpop.sfrf %479
  %p481 = scmp.eq.s32.totalorder %s480, 0
  %p482 = pneg %p481
  %484 = shalt.err (%p482)
  %s485 = scalar_lea.sflag [#allocation3], 1
  %486 = vsyncmov %s485
  %s487 = vpop.sfrf %486
  %p488 = scmp.eq.s32.totalorder %s487, 0
  %p489 = pneg %p488
  %491 = shalt.err (%p489)
  %s492 = scalar_lea.sflag [#allocation3], 2
  %493 = vsyncmov %s492
  %s494 = vpop.sfrf %493
  %p495 = scmp.eq.s32.totalorder %s494, 0
  %p496 = pneg %p495
  %498 = shalt.err (%p496)
  %s499 = scalar_lea.sflag [#allocation3], 3
  %500 = vsyncmov %s499
  %s501 = vpop.sfrf %500
  %p502 = scmp.eq.s32.totalorder %s501, 0
  %p503 = pneg %p502
  %505 = shalt.err (%p503)
  %s506 = scalar_lea.sflag [#allocation3], 4
  %507 = vsyncmov %s506
  %s508 = vpop.sfrf %507
  %p509 = scmp.eq.s32.totalorder %s508, 0
  %p510 = pneg %p509
  %512 = shalt.err (%p510)
  %s513 = scalar_lea.sflag [#allocation3], 5
  %514 = vsyncmov %s513
  %s515 = vpop.sfrf %514
  %p516 = scmp.eq.s32.totalorder %s515, 0
  %p517 = pneg %p516
  %519 = shalt.err (%p517)
  %s520 = scalar_lea.sflag [#allocation3], 6
  %521 = vsyncmov %s520
  %s522 = vpop.sfrf %521
  %p523 = scmp.eq.s32.totalorder %s522, 0
  %p524 = pneg %p523
  %526 = shalt.err (%p524)
  %s527 = scalar_lea.sflag [#allocation3], 7
  %528 = vsyncmov %s527
  %s529 = vpop.sfrf %528
  %p530 = scmp.eq.s32.totalorder %s529, 0
  %p531 = pneg %p530
  %533 = shalt.err (%p531)
  %s534 = scalar_lea.sflag [#allocation3], 8
  %535 = vsyncmov %s534
  %s536 = vpop.sfrf %535
  %p537 = scmp.eq.s32.totalorder %s536, 0
  %p538 = pneg %p537
  %540 = shalt.err (%p538)
  %s541 = scalar_lea.sflag [#allocation3], 9
  %542 = vsyncmov %s541
  %s543 = vpop.sfrf %542
  %p544 = scmp.eq.s32.totalorder %s543, 0
  %p545 = pneg %p544
  %547 = shalt.err (%p545)
  %s548 = scalar_lea.sflag [#allocation3], 10
  %549 = vsyncmov %s548
  %s550 = vpop.sfrf %549
  %p551 = scmp.eq.s32.totalorder %s550, 0
  %p552 = pneg %p551
  %554 = shalt.err (%p552)
  %s555 = scalar_lea.sflag [#allocation3], 11
  %556 = vsyncmov %s555
  %s557 = vpop.sfrf %556
  %p558 = scmp.eq.s32.totalorder %s557, 0
  %p559 = pneg %p558
  %561 = shalt.err (%p559)
  %s562 = scalar_lea.sflag [#allocation3], 12
  %563 = vsyncmov %s562
  %s564 = vpop.sfrf %563
  %p565 = scmp.eq.s32.totalorder %s564, 0
  %p566 = pneg %p565
  %568 = shalt.err (%p566)
  %s569 = scalar_lea.sflag [#allocation3], 13
  %570 = vsyncmov %s569
  %s571 = vpop.sfrf %570
  %p572 = scmp.eq.s32.totalorder %s571, 0
  %p573 = pneg %p572
  %575 = shalt.err (%p573)
  %s576 = scalar_lea.sflag [#allocation3], 14
  %577 = vsyncmov %s576
  %s578 = vpop.sfrf %577
  %p579 = scmp.eq.s32.totalorder %s578, 0
  %p580 = pneg %p579
  %582 = shalt.err (%p580)
  %s583 = scalar_lea.sflag [#allocation3], 15
  %584 = vsyncmov %s583
  %s585 = vpop.sfrf %584
  %p586 = scmp.eq.s32.totalorder %s585, 0
  %p587 = pneg %p586
  %589 = shalt.err (%p587)

</llo_original>
